<compile_context>
chip_gen: v5e
topology: v5e:2x2
jax: 0.10.0
libtpu: 0.0.40
codegen_flags: <defaults>
</compile_context>

<pallas_src>
import jax
import jax.numpy as jnp
from jax import lax
from jax.experimental import pallas as pl
from jax.experimental.pallas import tpu as pltpu

BN_EPS = 1e-5
LANE = 128
ROW_TILE_CAP = 2048    # grid-level row tile (multiple of 128)
ROW_CHUNK_CAP = 256    # in-kernel chunk: (256, 128) f32 = 32 vregs


def _round_up(x, m):
    return (x + m - 1) // m * m


def _pick_row_tile(hw):
    """Grid-level row tile. Small images: full 8-padded extent (single tile).
    Large images: a big multiple-of-128 tile; remainder rows are zero-padded
    and excluded from the statistics via the exact element count."""
    hw8 = _round_up(hw, 8)
    return hw8 if hw8 <= ROW_TILE_CAP else ROW_TILE_CAP


def _pick_row_chunk(tr):
    """Largest multiple-of-8 divisor of tr capped at ROW_CHUNK_CAP; bounds the
    per-chunk f32 tile to <= 32 vregs so nothing spills."""
    for c in range(min(tr, ROW_CHUNK_CAP), 7, -1):
        if c % 8 == 0 and tr % c == 0:
            return c
    return tr


def _vmem_limit_bytes():
    """Generation-aware scoped-VMEM budget: ~48 MiB on v7x (64 MiB physical),
    up to 96 MiB on v5e/v6e (128 MiB physical)."""
    cap = None
    try:
        info = pltpu.get_tpu_info()
        for name in ("vmem_capacity_bytes", "vmem_size_bytes"):
            cap = getattr(info, name, None)
            if cap:
                break
    except Exception:
        cap = None
    if not cap:
        cap = 64 * 1024 * 1024
    return int(min(96 * 1024 * 1024, (cap * 3) // 4))


def _row_start(i, ch):
    start = i * ch
    if isinstance(start, int):
        return start
    return pl.multiple_of(start, ch)


def _chunk_iter(n_chunks, body, carry):
    """carry = body(i, carry) for i in [0, n_chunks). Static Python loop (all
    static slices) for short trip counts, lax.fori_loop otherwise."""
    if n_chunks <= 16:
        for i in range(n_chunks):
            carry = body(i, carry)
        return carry
    return lax.fori_loop(0, n_chunks, body, carry)


def _conv_stats_kernel(xc_ref, w_ref, stats_ref):
    """One (image, row-tile) per grid step; emits raw BN statistics only.

    xc_ref:    (1, TR, 9*Cin) bf16  im2col'd input rows (padded rows are zero)
    w_ref:     (9*Cin, Cp)    bf16  conv weights, Cout zero-padded to Cp lanes
    stats_ref: (1, 1, 2, Cp)  f32   row 0: sum(y); row 1: sum(y*y)
    """
    tr = xc_ref.shape[1]
    cp = w_ref.shape[1]
    ch = _pick_row_chunk(tr)
    w = w_ref[...]

    def body(i, carry):
        s, ss = carry
        row = _row_start(i, ch)
        y = jnp.dot(xc_ref[0, pl.ds(row, ch), :], w,
                    preferred_element_type=jnp.float32)        # (ch, Cp) f32
        s = s + jnp.sum(y, axis=0, keepdims=True)
        ss = ss + jnp.sum(y * y, axis=0, keepdims=True)
        return s, ss

    zeros = jnp.zeros((1, cp), jnp.float32)
    s, ss = _chunk_iter(tr // ch, body, (zeros, zeros))
    stats_ref[0, 0, 0:1, :] = s
    stats_ref[0, 0, 1:2, :] = ss


def _conv_bn_kernel(xc_ref, w_ref, scale_ref, shift_ref, out_ref):
    """Recompute the cheap conv, apply fused BN scale/shift and write the tile
    directly in flattened NCHW layout (row axis on lanes) via an XLU transpose.

    out_ref: (1, Cout, TR) f32
    """
    tr = xc_ref.shape[1]
    cout = out_ref.shape[1]
    ch = _pick_row_chunk(tr)
    w = w_ref[...]
    scale = scale_ref[...]          # (1, Cp)
    shift = shift_ref[...]          # (1, Cp)

    def body(i, carry):
        row = _row_start(i, ch)
        y = jnp.dot(xc_ref[0, pl.ds(row, ch), :], w,
                    preferred_element_type=jnp.float32)        # (ch, Cp) f32
        y = y * scale + shift
        yt = jnp.transpose(y)                                  # (Cp, ch), XLU
        out_ref[0, :, pl.ds(row, ch)] = yt[:cout, :]
        return carry

    _chunk_iter(tr // ch, body, 0)


@jax.jit
def conv_bn_forward(x_nchw, w_oihw, gamma, beta):
    """PyTorch-compatible front end: NCHW in, NCHW out (float32)."""
    N, Cin, H, W = x_nchw.shape
    Cout = w_oihw.shape[0]
    Cp = _round_up(Cout, LANE)
    HW = H * W
    K9 = 9 * Cin

    TR = _pick_row_tile(HW)
    HWp = _round_up(HW, TR)
    R = HWp // TR
    vmem_limit = _vmem_limit_bytes()

    # ---- layout glue: NCHW -> im2col (N, HWp, 9*Cin) bf16 (tiny vs y when Cin<<Cout) ----
    x_nhwc = jnp.transpose(x_nchw, (0, 2, 3, 1)).astype(jnp.bfloat16)
    x_pad = jnp.pad(x_nhwc, ((0, 0), (1, 1), (1, 1), (0, 0)))
    patches = [x_pad[:, dy:dy + H, dx:dx + W, :]
               for dy in range(3) for dx in range(3)]
    x_col = jnp.stack(patches, axis=3).reshape(N, HW, K9)
    if HWp != HW:
        # Zero rows contribute 0 to both raw sums and are sliced off the output.
        x_col = jnp.pad(x_col, ((0, 0), (0, HWp - HW), (0, 0)))

    # OIHW -> (9*Cin, Cp): tap-major / Cin-minor rows, Cout zero-padded to 128 lanes.
    w_mat = jnp.transpose(w_oihw, (2, 3, 1, 0)).reshape(K9, Cout)
    w_mat = jnp.pad(w_mat, ((0, 0), (0, Cp - Cout))).astype(jnp.bfloat16)

    # ---------- pass 1: per-(image, row-tile) raw BN statistics ----------
    stats = pl.pallas_call(
        _conv_stats_kernel,
        grid=(N, R),
        in_specs=[
            pl.BlockSpec((1, TR, K9), lambda n, r: (n, r, 0)),
            pl.BlockSpec((K9, Cp), lambda n, r: (0, 0)),       # resident weights
        ],
        out_specs=pl.BlockSpec((1, 1, 2, Cp), lambda n, r: (n, r, 0, 0)),
        out_shape=jax.ShapeDtypeStruct((N, R, 2, Cp), jnp.float32),
        compiler_params=pltpu.CompilerParams(
            dimension_semantics=("parallel", "parallel"),
            vmem_limit_bytes=vmem_limit),
    )(x_col, w_mat)

    # ---------- glue: combine stats -> per-channel scale / shift ----------
    count = float(N * HW)
    sum_c = jnp.sum(stats[:, :, 0, :], axis=(0, 1))            # (Cp,)
    sumsq_c = jnp.sum(stats[:, :, 1, :], axis=(0, 1))          # (Cp,)
    mean = sum_c / count
    var = jnp.maximum(sumsq_c / count - mean * mean, 0.0)      # biased, as BN uses
    inv_std = lax.rsqrt(var + BN_EPS)
    gamma_p = jnp.pad(gamma.astype(jnp.float32), (0, Cp - Cout))
    beta_p = jnp.pad(beta.astype(jnp.float32), (0, Cp - Cout))
    scale = (gamma_p * inv_std).reshape(1, Cp)
    shift = (beta_p - mean * gamma_p * inv_std).reshape(1, Cp)
    # TODO(synk): BatchNorm2d's running_mean/running_var momentum update
    # (training-time buffer side effect) is not emitted; the forward output
    # only needs the batch statistics.

    # ---------- pass 2: conv (recompute) + normalize + affine, NCHW output ----------
    y_out = pl.pallas_call(
        _conv_bn_kernel,
        grid=(N, R),
        in_specs=[
            pl.BlockSpec((1, TR, K9), lambda n, r: (n, r, 0)),
            pl.BlockSpec((K9, Cp), lambda n, r: (0, 0)),
            pl.BlockSpec((1, Cp), lambda n, r: (0, 0)),
            pl.BlockSpec((1, Cp), lambda n, r: (0, 0)),
        ],
        out_specs=pl.BlockSpec((1, Cout, TR), lambda n, r: (n, 0, r)),
        out_shape=jax.ShapeDtypeStruct((N, Cout, HWp), jnp.float32),
        compiler_params=pltpu.CompilerParams(
            dimension_semantics=("parallel", "parallel"),
            vmem_limit_bytes=vmem_limit),
    )(x_col, w_mat, scale, shift)

    y_out = y_out if HWp == HW else y_out[:, :, :HW]
    return y_out.reshape(N, Cout, H, W)


def _reference(x_nchw, w_oihw, gamma, beta):
    """Pure-JAX reference. Inputs rounded to bf16 to mirror the kernel's bf16
    MXU operands; all accumulation / BN math stays in f32."""
    xb = x_nchw.astype(jnp.bfloat16).astype(jnp.float32)
    wb = w_oihw.astype(jnp.bfloat16).astype(jnp.float32)
    x_nhwc = jnp.transpose(xb, (0, 2, 3, 1))
    w_hwio = jnp.transpose(wb, (2, 3, 1, 0))
    y = lax.conv_general_dilated(
        x_nhwc, w_hwio, window_strides=(1, 1), padding="SAME",
        dimension_numbers=("NHWC", "HWIO", "NHWC"),
        preferred_element_type=jnp.float32)
    mean = y.mean(axis=(0, 1, 2))
    var = y.var(axis=(0, 1, 2))  # biased, matching PyTorch BN normalization
    y = (y - mean) * lax.rsqrt(var + BN_EPS) * gamma + beta
    return jnp.transpose(y, (0, 3, 1, 2))


if __name__ == "__main__":
    key = jax.random.PRNGKey(0)
    k_x, k_w, k_g, k_b = jax.random.split(key, 4)

    N, Cin, Cout, H, W = 2, 4, 8, 16, 16

    x = jax.random.normal(k_x, (N, Cin, H, W), dtype=jnp.float32)
    # nn.Conv2d weight shape: (Cout, Cin, 3, 3); deterministic synthetic init.
    w = jax.random.normal(k_w, (Cout, Cin, 3, 3), dtype=jnp.float32) * 0.1
    # nn.BatchNorm2d affine params (nontrivial values).
    gamma = 0.5 + jax.random.uniform(k_g, (Cout,), dtype=jnp.float32)
    beta = 0.1 * jax.random.normal(k_b, (Cout,), dtype=jnp.float32)

    out = conv_bn_forward(x, w, gamma, beta)
    jax.block_until_ready(out)

    ref = _reference(x, w, gamma, beta)
    assert out.shape == (N, Cout, H, W), out.shape
    err = float(jnp.max(jnp.abs(out - ref)))
    assert err < 2e-3, err

    print("KERNEL_OK")
</pallas_src>

<mosaic_0001>
module attributes {stable_mosaic.version = 11 : i64} {
  func.func @_conv_stats_kernel(%arg0: i32, %arg1: i32, %arg2: memref<1x256x36xbf16, #tpu.memory_space<vmem>>, %arg3: memref<36x128xbf16, #tpu.memory_space<vmem>>, %arg4: memref<1x1x2x128xf32, #tpu.memory_space<vmem>>) attributes {dimension_semantics = [#tpu.dimension_semantics<parallel>, #tpu.dimension_semantics<parallel>], iteration_bounds = array<i64: 2, 1>, scalar_prefetch = 0 : i64, scratch_operands = 0 : i64, tpu.core_type = #tpu.core_type<tc>, window_params = [{transform_indices = @transform_0, window_bounds = array<i64: 1, 256, 36>}, {pipeline_mode = #tpu.pipeline_mode<synchronous>, transform_indices = @transform_1, window_bounds = array<i64: 36, 128>}, {transform_indices = @transform_2, window_bounds = array<i64: 1, 1, 2, 128>}]} {
    %c0 = arith.constant 0 : index
    %c0_0 = arith.constant 0 : index
    %0 = vector.load %arg3[%c0, %c0_0] : memref<36x128xbf16, #tpu.memory_space<vmem>>, vector<36x128xbf16>
    %cst = arith.constant 0.000000e+00 : f32
    %1 = vector.broadcast %cst : f32 to vector<1x128xf32>
    %c0_1 = arith.constant 0 : index
    %c0_2 = arith.constant 0 : index
    %c0_3 = arith.constant 0 : index
    %2 = vector.load %arg2[%c0_1, %c0_2, %c0_3] : memref<1x256x36xbf16, #tpu.memory_space<vmem>>, vector<1x256x36xbf16>
    %3 = vector.shape_cast %2 : vector<1x256x36xbf16> to vector<256x36xbf16>
    %cst_4 = arith.constant dense<0.000000e+00> : vector<256x128xf32>
    %4 = tpu.matmul %3, %0, %cst_4 {dimension_numbers = #tpu.dot_dimension_numbers<[1], [0], [0], [1], [0, 0, 1, 1], [], []>} : vector<256x36xbf16>, vector<36x128xbf16>, vector<256x128xf32> -> vector<256x128xf32>
    %cst_5 = arith.constant dense<0.000000e+00> : vector<128xf32>
    %5 = vector.multi_reduction <add>, %4, %cst_5 [0] : vector<256x128xf32> to vector<128xf32>
    %6 = vector.shape_cast %5 : vector<128xf32> to vector<1x128xf32>
    %7 = arith.addf %1, %6 : vector<1x128xf32>
    %8 = arith.mulf %4, %4 : vector<256x128xf32>
    %cst_6 = arith.constant dense<0.000000e+00> : vector<128xf32>
    %9 = vector.multi_reduction <add>, %8, %cst_6 [0] : vector<256x128xf32> to vector<128xf32>
    %10 = vector.shape_cast %9 : vector<128xf32> to vector<1x128xf32>
    %11 = arith.addf %1, %10 : vector<1x128xf32>
    %c0_7 = arith.constant 0 : index
    %c0_8 = arith.constant 0 : index
    %c0_9 = arith.constant 0 : index
    %c0_10 = arith.constant 0 : index
    %12 = vector.load %arg4[%c0_7, %c0_8, %c0_9, %c0_10] : memref<1x1x2x128xf32, #tpu.memory_space<vmem>>, vector<1x1x1x128xf32>
    %13 = vector.shape_cast %12 : vector<1x1x1x128xf32> to vector<1x128xf32>
    %14 = vector.shape_cast %7 : vector<1x128xf32> to vector<1x1x1x128xf32>
    tpu.vector_store %arg4[%c0_7, %c0_8, %c0_9, %c0_10], %14 {strides = array<i32>} : memref<1x1x2x128xf32, #tpu.memory_space<vmem>>, vector<1x1x1x128xf32>,
    %c0_11 = arith.constant 0 : index
    %c0_12 = arith.constant 0 : index
    %c1 = arith.constant 1 : index
    %c0_13 = arith.constant 0 : index
    %15 = vector.load %arg4[%c0_11, %c0_12, %c1, %c0_13] : memref<1x1x2x128xf32, #tpu.memory_space<vmem>>, vector<1x1x1x128xf32>
    %16 = vector.shape_cast %15 : vector<1x1x1x128xf32> to vector<1x128xf32>
    %17 = vector.shape_cast %11 : vector<1x128xf32> to vector<1x1x1x128xf32>
    tpu.vector_store %arg4[%c0_11, %c0_12, %c1, %c0_13], %17 {strides = array<i32>} : memref<1x1x2x128xf32, #tpu.memory_space<vmem>>, vector<1x1x1x128xf32>,
    return
  }
  func.func @transform_0(%arg0: i32, %arg1: i32) -> (i32, i32, i32) {
    %c0_i32 = arith.constant 0 : i32
    %c0_i32_0 = arith.constant 0 : i32
    return %arg0, %arg1, %c0_i32 : i32, i32, i32
  }
  func.func @transform_1(%arg0: i32, %arg1: i32) -> (i32, i32) {
    %c0_i32 = arith.constant 0 : i32
    %c0_i32_0 = arith.constant 0 : i32
    %c0_i32_1 = arith.constant 0 : i32
    return %c0_i32, %c0_i32_0 : i32, i32
  }
  func.func @transform_2(%arg0: i32, %arg1: i32) -> (i32, i32, i32, i32) {
    %c0_i32 = arith.constant 0 : i32
    %c0_i32_0 = arith.constant 0 : i32
    %c0_i32_1 = arith.constant 0 : i32
    return %arg0, %arg1, %c0_i32, %c0_i32_0 : i32, i32, i32, i32
  }
}

module attributes {stable_mosaic.version = 11 : i64} {
  func.func @_conv_bn_kernel(%arg0: i32, %arg1: i32, %arg2: memref<1x256x36xbf16, #tpu.memory_space<vmem>>, %arg3: memref<36x128xbf16, #tpu.memory_space<vmem>>, %arg4: memref<1x128xf32, #tpu.memory_space<vmem>>, %arg5: memref<1x128xf32, #tpu.memory_space<vmem>>, %arg6: memref<1x8x256xf32, #tpu.memory_space<vmem>>) attributes {dimension_semantics = [#tpu.dimension_semantics<parallel>, #tpu.dimension_semantics<parallel>], iteration_bounds = array<i64: 2, 1>, scalar_prefetch = 0 : i64, scratch_operands = 0 : i64, tpu.core_type = #tpu.core_type<tc>, window_params = [{transform_indices = @transform_0, window_bounds = array<i64: 1, 256, 36>}, {pipeline_mode = #tpu.pipeline_mode<synchronous>, transform_indices = @transform_1, window_bounds = array<i64: 36, 128>}, {pipeline_mode = #tpu.pipeline_mode<synchronous>, transform_indices = @transform_2, window_bounds = array<i64: 1, 128>}, {pipeline_mode = #tpu.pipeline_mode<synchronous>, transform_indices = @transform_3, window_bounds = array<i64: 1, 128>}, {transform_indices = @transform_4, window_bounds = array<i64: 1, 8, 256>}]} {
    %c0 = arith.constant 0 : index
    %c0_0 = arith.constant 0 : index
    %0 = vector.load %arg3[%c0, %c0_0] : memref<36x128xbf16, #tpu.memory_space<vmem>>, vector<36x128xbf16>
    %c0_1 = arith.constant 0 : index
    %c0_2 = arith.constant 0 : index
    %1 = vector.load %arg4[%c0_1, %c0_2] : memref<1x128xf32, #tpu.memory_space<vmem>>, vector<1x128xf32>
    %c0_3 = arith.constant 0 : index
    %c0_4 = arith.constant 0 : index
    %2 = vector.load %arg5[%c0_3, %c0_4] : memref<1x128xf32, #tpu.memory_space<vmem>>, vector<1x128xf32>
    %c0_5 = arith.constant 0 : index
    %c0_6 = arith.constant 0 : index
    %c0_7 = arith.constant 0 : index
    %3 = vector.load %arg2[%c0_5, %c0_6, %c0_7] : memref<1x256x36xbf16, #tpu.memory_space<vmem>>, vector<1x256x36xbf16>
    %4 = vector.shape_cast %3 : vector<1x256x36xbf16> to vector<256x36xbf16>
    %cst = arith.constant dense<0.000000e+00> : vector<256x128xf32>
    %5 = tpu.matmul %4, %0, %cst {dimension_numbers = #tpu.dot_dimension_numbers<[1], [0], [0], [1], [0, 0, 1, 1], [], []>} : vector<256x36xbf16>, vector<36x128xbf16>, vector<256x128xf32> -> vector<256x128xf32>
    %6 = vector.broadcast %1 : vector<1x128xf32> to vector<256x128xf32>
    %7 = arith.mulf %5, %6 : vector<256x128xf32>
    %8 = vector.broadcast %2 : vector<1x128xf32> to vector<256x128xf32>
    %9 = arith.addf %7, %8 : vector<256x128xf32>
    %10 = tpu.transpose %9, [1, 0] : vector<256x128xf32> -> vector<128x256xf32>
    %11 = vector.extract_strided_slice %10 {offsets = [0, 0], sizes = [8, 256], strides = [1, 1]} : vector<128x256xf32> to vector<8x256xf32>
    %c0_8 = arith.constant 0 : index
    %c0_9 = arith.constant 0 : index
    %c0_10 = arith.constant 0 : index
    %12 = vector.load %arg6[%c0_8, %c0_9, %c0_10] : memref<1x8x256xf32, #tpu.memory_space<vmem>>, vector<1x8x256xf32>
    %13 = vector.shape_cast %12 : vector<1x8x256xf32> to vector<8x256xf32>
    %14 = vector.shape_cast %11 : vector<8x256xf32> to vector<1x8x256xf32>
    tpu.vector_store %arg6[%c0_8, %c0_9, %c0_10], %14 {strides = array<i32>} : memref<1x8x256xf32, #tpu.memory_space<vmem>>, vector<1x8x256xf32>,
    return
  }
  func.func @transform_0(%arg0: i32, %arg1: i32) -> (i32, i32, i32) {
    %c0_i32 = arith.constant 0 : i32
    %c0_i32_0 = arith.constant 0 : i32
    return %arg0, %arg1, %c0_i32 : i32, i32, i32
  }
  func.func @transform_1(%arg0: i32, %arg1: i32) -> (i32, i32) {
    %c0_i32 = arith.constant 0 : i32
    %c0_i32_0 = arith.constant 0 : i32
    %c0_i32_1 = arith.constant 0 : i32
    return %c0_i32, %c0_i32_0 : i32, i32
  }
  func.func @transform_2(%arg0: i32, %arg1: i32) -> (i32, i32) {
    %c0_i32 = arith.constant 0 : i32
    %c0_i32_0 = arith.constant 0 : i32
    %c0_i32_1 = arith.constant 0 : i32
    return %c0_i32, %c0_i32_0 : i32, i32
  }
  func.func @transform_3(%arg0: i32, %arg1: i32) -> (i32, i32) {
    %c0_i32 = arith.constant 0 : i32
    %c0_i32_0 = arith.constant 0 : i32
    %c0_i32_1 = arith.constant 0 : i32
    return %c0_i32, %c0_i32_0 : i32, i32
  }
  func.func @transform_4(%arg0: i32, %arg1: i32) -> (i32, i32, i32) {
    %c0_i32 = arith.constant 0 : i32
    %c0_i32_0 = arith.constant 0 : i32
    return %arg0, %c0_i32, %arg1 : i32, i32, i32
  }
}

</mosaic_0001>

<llo_original>
// kernel: conv_bn_forward.3
$region0: #{conv_bn_forward.3}
  #allocation0 [shape = 'u32[]', space=smem, size = 0x4, offset = 0x4, fixed_abs, tag = 'smem constant byte address 0x4 - core index']
  #allocation1 [shape = 'u32[72,128]{1,0:T(1,128)}', space=vmem, size = 0x9000, scoped, tag = 'internal scratch']
  %s0 = inlined_call_operand.vmem [shape: bf16[2,256,36], index: 0, kind: input, shape index: {}]
  %s1 = inlined_call_operand.vmem [shape: bf16[36,128], index: 1, kind: input, shape index: {}]
  %s2 = inlined_call_operand.vmem [shape: f32[1,128], index: 2, kind: input, shape index: {}]
  %s3 = inlined_call_operand.vmem [shape: f32[1,128], index: 3, kind: input, shape index: {}]
  %s4 = inlined_call_operand.vmem [shape: f32[2,8,256], index: 4, kind: output, shape index: {}]
  %s5 = sld [smem:[#allocation0]]
  $region49: #{conv_bn_forward.3} parent=0
    _
  %s7 = ssub.s32 1, %s5
  %s8 = scalar_select 0, %s7, %s5
  loop: start=0, step=1, limit=4
  $region2: #{conv_bn_forward.3} parent=0 // loop_pre_header
    _
  $region3: #{conv_bn_forward.3} parent=0 // loop_header
    %s10 = sphi 0, %s14
    %p11 = scmp.ge.s32.totalorder %s10, 4
    %s17 = sphi 0, %s29
    %s18 = sphi 0, %s25
    %s19 = sphi 0, %s17
    %s20 = sphi 0, %s18
    %s21 = sphi 0, %s19
    %s22 = sphi 0, %s20
    %s34 = sphi 0, %s36
    %s37 = sphi 0, %s34
    %s38 = sphi 0, %s37
    %s54 = sphi 0, %s38
    %s58 = sphi 0, %s58
    %s60 = sphi 0, %s58
    %s61 = sphi 0, %s60
    %s75 = sphi 0, %s61
    %s79 = sphi 0, %s79
    %s81 = sphi 0, %s79
    %s82 = sphi 0, %s81
    %s96 = sphi 0, %s82
    %s100 = sphi 0, %s100
    %s102 = sphi 0, %s100
    %s103 = sphi 0, %s102
    %s117 = sphi 0, %s103
    %s125 = sphi 0, %s127
    %s128 = sphi 0, %s125
    %s129 = sphi 0, %s128
    %s145 = sphi 0, %s129
  $region4: #{conv_bn_forward.3} parent=0 // loop_header_branch
    %13 = sbr.rel (%p11) target = $region8
  $region5: #{conv_bn_forward.3} parent=0 // loop_body
    %s15 = ssub.s32 %s10, 1
    %s16 = ssub.s32 %s10, 2
    %s23 = sadd.s32 1, %s18
    %p24 = scmp.ge.s32.totalorder %s23, 1
    %s25 = scalar_select %p24, 0, %s23
    %s26 = sadd.s32 1, %s17
    %s27 = scalar_select %p24, %s26, %s17
    %p28 = scmp.ge.s32.totalorder %s27, 2
    %s29 = scalar_select %p28, 0, %s27
    %s30 = ssub.s32 %s17, %s29
    %s31 = ssub.s32 %s18, %s25
    %s32 = sor.u32 %s30, %s31
    %p33 = scmp.eq.s32.totalorder %s32, 0
    %s35 = sadd.s32 %s34, 1
    %s36 = scalar_select %p33, %s34, %s35
    %p39 = pneg %p33
    %p40 = scmp.eq.s32.totalorder %s10, 1
    %p41 = por %p39, %p40
    %p42 = scmp.ne.s32.totalorder %s34, %s37
    %p43 = scmp.eq.s32.totalorder %s10, 0
    %p44 = por %p42, %p43
    %p45 = scmp.ne.s32.totalorder %s34, %s37
    %p46 = scmp.eq.s32.totalorder %s15, 1
    %p47 = por %p45, %p46
    %p48 = scmp.ne.s32.totalorder %s37, %s38
    %p49 = scmp.eq.s32.totalorder %s15, 0
    %p50 = por %p48, %p49
    %p51 = scmp.ne.s32.totalorder %s37, %s38
    %p52 = scmp.eq.s32.totalorder %s16, 1
    %p53 = por %p51, %p52
    %p55 = scmp.ne.s32.totalorder %s38, %s54
    %p56 = scmp.eq.s32.totalorder %s16, 0
    %p57 = por %p55, %p56
    %s59 = sadd.s32 %s58, 1
    %p62 = scmp.eq.s32.totalorder %s10, 1
    %p63 = scmp.ne.s32.totalorder %s58, %s60
    %p64 = scmp.eq.s32.totalorder %s10, 0
    %p65 = por %p63, %p64
    %p66 = scmp.ne.s32.totalorder %s58, %s60
    %p67 = scmp.eq.s32.totalorder %s15, 1
    %p68 = por %p66, %p67
    %p69 = scmp.ne.s32.totalorder %s60, %s61
    %p70 = scmp.eq.s32.totalorder %s15, 0
    %p71 = por %p69, %p70
    %p72 = scmp.ne.s32.totalorder %s60, %s61
    %p73 = scmp.eq.s32.totalorder %s16, 1
    %p74 = por %p72, %p73
    %p76 = scmp.ne.s32.totalorder %s61, %s75
    %p77 = scmp.eq.s32.totalorder %s16, 0
    %p78 = por %p76, %p77
    %s80 = sadd.s32 %s79, 1
    %p83 = scmp.eq.s32.totalorder %s10, 1
    %p84 = scmp.ne.s32.totalorder %s79, %s81
    %p85 = scmp.eq.s32.totalorder %s10, 0
    %p86 = por %p84, %p85
    %p87 = scmp.ne.s32.totalorder %s79, %s81
    %p88 = scmp.eq.s32.totalorder %s15, 1
    %p89 = por %p87, %p88
    %p90 = scmp.ne.s32.totalorder %s81, %s82
    %p91 = scmp.eq.s32.totalorder %s15, 0
    %p92 = por %p90, %p91
    %p93 = scmp.ne.s32.totalorder %s81, %s82
    %p94 = scmp.eq.s32.totalorder %s16, 1
    %p95 = por %p93, %p94
    %p97 = scmp.ne.s32.totalorder %s82, %s96
    %p98 = scmp.eq.s32.totalorder %s16, 0
    %p99 = por %p97, %p98
    %s101 = sadd.s32 %s100, 1
    %p104 = scmp.eq.s32.totalorder %s10, 1
    %p105 = scmp.ne.s32.totalorder %s100, %s102
    %p106 = scmp.eq.s32.totalorder %s10, 0
    %p107 = por %p105, %p106
    %p108 = scmp.ne.s32.totalorder %s100, %s102
    %p109 = scmp.eq.s32.totalorder %s15, 1
    %p110 = por %p108, %p109
    %p111 = scmp.ne.s32.totalorder %s102, %s103
    %p112 = scmp.eq.s32.totalorder %s15, 0
    %p113 = por %p111, %p112
    %p114 = scmp.ne.s32.totalorder %s102, %s103
    %p115 = scmp.eq.s32.totalorder %s16, 1
    %p116 = por %p114, %p115
    %p118 = scmp.ne.s32.totalorder %s103, %s117
    %p119 = scmp.eq.s32.totalorder %s16, 0
    %p120 = por %p118, %p119
    %s121 = ssub.s32 %s17, %s29
    %s122 = ssub.s32 %s18, %s25
    %s123 = sor.u32 %s121, %s122
    %p124 = scmp.eq.s32.totalorder %s123, 0
    %s126 = sadd.s32 %s125, 1
    %s127 = scalar_select %p124, %s125, %s126
    %p130 = pneg %p124
    %p131 = scmp.eq.s32.totalorder %s10, 1
    %p132 = por %p130, %p131
    %p133 = scmp.ne.s32.totalorder %s125, %s128
    %p134 = scmp.eq.s32.totalorder %s10, 0
    %p135 = por %p133, %p134
    %p136 = scmp.ne.s32.totalorder %s125, %s128
    %p137 = scmp.eq.s32.totalorder %s15, 1
    %p138 = por %p136, %p137
    %p139 = scmp.ne.s32.totalorder %s128, %s129
    %p140 = scmp.eq.s32.totalorder %s15, 0
    %p141 = por %p139, %p140
    %p142 = scmp.ne.s32.totalorder %s128, %s129
    %p143 = scmp.eq.s32.totalorder %s16, 1
    %p144 = por %p142, %p143
    %p146 = scmp.ne.s32.totalorder %s129, %s145
    %p147 = scmp.eq.s32.totalorder %s16, 0
    %p148 = por %p146, %p147
    %p149 = scmp.le.s32.totalorder 1, %s10
    %p150 = scmp.lt.s32.totalorder %s10, 3
    %p151 = pnand %p149, %p150
    %p152 = pneg %p151
    // Predicated region
    $region9: #{conv_bn_forward.3} parent=5 // pred_check
      _
    $region10: #{conv_bn_forward.3} parent=5 // pred_check_branch
      %154 = sbr.rel (%p151) target = $region12
    $region11: #{conv_bn_forward.3} parent=5 // pred_region
      %s155 = ssub.s32 %s10, 1
      // Predicated region
      $region13: #{conv_bn_forward.3} parent=11 // pred_check
        %p156 = pneg %p71
      $region14: #{conv_bn_forward.3} parent=11 // pred_check_branch
        %158 = sbr.rel (%p156) target = $region16
      $region15: #{conv_bn_forward.3} parent=11 // pred_region
        _
      $region16: #{conv_bn_forward.3} parent=11 // pred_fallthru
        _
      // Predicated region
      $region17: #{conv_bn_forward.3} parent=11 // pred_check
        %p159 = pneg %p92
      $region18: #{conv_bn_forward.3} parent=11 // pred_check_branch
        %161 = sbr.rel (%p159) target = $region20
      $region19: #{conv_bn_forward.3} parent=11 // pred_region
        _
      $region20: #{conv_bn_forward.3} parent=11 // pred_fallthru
        _
      // Predicated region
      $region21: #{conv_bn_forward.3} parent=11 // pred_check
        %p162 = pneg %p113
      $region22: #{conv_bn_forward.3} parent=11 // pred_check_branch
        %164 = sbr.rel (%p162) target = $region24
      $region23: #{conv_bn_forward.3} parent=11 // pred_region
        _
      $region24: #{conv_bn_forward.3} parent=11 // pred_fallthru
        _
    $region12: #{conv_bn_forward.3} parent=5 // pred_fallthru
      _
    %p165 = scmp.lt.s32.totalorder %s10, 2
    // Predicated region
    $region25: #{conv_bn_forward.3} parent=5 // pred_check
      %p166 = pneg %p165
    $region26: #{conv_bn_forward.3} parent=5 // pred_check_branch
      %168 = sbr.rel (%p166) target = $region28
    $region27: #{conv_bn_forward.3} parent=5 // pred_region
      // Predicated region
      $region29: #{conv_bn_forward.3} parent=27 // pred_check
        %p169 = pneg %p44
      $region30: #{conv_bn_forward.3} parent=27 // pred_check_branch
        %171 = sbr.rel (%p169) target = $region32
      $region31: #{conv_bn_forward.3} parent=27 // pred_region
        %s172 = smul.u32 32, %s18
        %p173 = scmp.lt.s32.totalorder %s17, 1
        %s174 = scalar_select %p173, %s17, 1
        %p175 = scmp.lt.s32.totalorder %s172, 31
        %s176 = scalar_select %p175, %s172, 31
        %s177 = smul.addr %s174, 32
        %s178 = sadd.s32 %s176, %s177
        %s179 = smul.addr %s178, 4
        %s180 = scalar_lea.vmem %s0, %s179
        %s181 = smul.u32 32, %s18
      $region32: #{conv_bn_forward.3} parent=27 // pred_fallthru
        _
    $region28: #{conv_bn_forward.3} parent=5 // pred_fallthru
      _
    %p182 = scmp.le.s32.totalorder 1, %s10
    %p183 = scmp.lt.s32.totalorder %s10, 3
    %p184 = pnand %p182, %p183
    %p185 = pneg %p184
    // Predicated region
    $region33: #{conv_bn_forward.3} parent=5 // pred_check
      _
    $region34: #{conv_bn_forward.3} parent=5 // pred_check_branch
      %187 = sbr.rel (%p184) target = $region36
    $region35: #{conv_bn_forward.3} parent=5 // pred_region
      %s188 = ssub.s32 %s10, 1
      %s189 = smul.u32 32, %s20
      %p190 = scmp.lt.s32.totalorder %s19, 1
      %s191 = scalar_select %p190, %s19, 1
      %p192 = scmp.lt.s32.totalorder %s189, 31
      %s193 = scalar_select %p192, %s189, 31
      %s194 = smul.addr %s191, 32
      %s195 = sadd.s32 %s193, %s194
      %s196 = smul.addr %s195, 4
      %s197 = scalar_lea.vmem %s0, %s196
      %p198 = pneg %p50
      %p199 = pneg %p47
      %p200 = pneg %p71
      %p201 = pneg %p68
      %p202 = pneg %p92
      %p203 = pneg %p89
      %p204 = pneg %p113
      %p205 = pneg %p110
      %p206 = pneg %p141
      %p207 = pneg %p138
      %s208 = smul.u32 2, %s20
      %p209 = scmp.lt.s32.totalorder %s19, 1
      %s210 = scalar_select %p209, %s19, 1
      %p211 = scmp.lt.s32.totalorder %s208, 1
      %s212 = scalar_select %p211, %s208, 1
      %s213 = smul.addr %s210, 2
      %s214 = sadd.s32 %s212, %s213
      %s215 = smul.addr %s214, 8
      %s216 = scalar_lea.vmem %s4, %s215
      %s217 = smul.u32 32, %s20
      %p218 = scmp.lt.s32.totalorder %s19, 1
      %s219 = scalar_select %p218, %s19, 1
      %p220 = scmp.lt.s32.totalorder %s217, 31
      %s221 = scalar_select %p220, %s217, 31
      %s222 = smul.addr %s219, 32
      %s223 = sadd.s32 %s221, %s222
      %s224 = smul.addr %s223, 4
      %s225 = scalar_lea.vmem %s0, %s224
      %s226 = smul.u32 32, %s20
      %s227 = smul.u32 2, %s20
      %p228 = scmp.lt.s32.totalorder %s19, 1
      %s229 = scalar_select %p228, %s19, 1
      %p230 = scmp.lt.s32.totalorder %s227, 1
      %s231 = scalar_select %p230, %s227, 1
      %s232 = smul.addr %s229, 2
      %s233 = sadd.s32 %s231, %s232
      %s234 = smul.addr %s233, 8
      %s235 = scalar_lea.vmem %s4, %s234
      %s236 = smul.u32 2, %s20
      %v238 = vld [vmem:[%s1] sm:$0xf]
      %v239 = vld [vmem:[%s1 + $0x4] sm:$0xf]
      %v240 = vld [vmem:[%s1 + $0x8] sm:$0xf]
      %v241 = vld [vmem:[%s1 + $0xc] sm:$0xf]
      %v242 = vld [vmem:[%s1 + $0x10] sm:$0x3]
      %v243 = vld [vmem:[%s2] sm:$0x1]
      %v244 = vld [vmem:[%s3] sm:$0x1]
      %v245 = vld [vmem:[%s225] sm:$0xf]
      %v246 = vld [vmem:[%s225 + $0x4] sm:$0xf]
      %v247 = vld [vmem:[%s225 + $0x8] sm:$0xf]
      %v248 = vld [vmem:[%s225 + $0xc] sm:$0xf]
      %v249 = vld [vmem:[%s225 + $0x10] sm:$0xf]
      %v250 = vld [vmem:[%s225 + $0x14] sm:$0xf]
      %v251 = vld [vmem:[%s225 + $0x18] sm:$0xf]
      %v252 = vld [vmem:[%s225 + $0x1c] sm:$0xf]
      %v253 = vld [vmem:[%s225 + $0x20] sm:$0xf]
      %v254 = vld [vmem:[%s225 + $0x24] sm:$0xf]
      %v255 = vld [vmem:[%s225 + $0x28] sm:$0xf]
      %v256 = vld [vmem:[%s225 + $0x2c] sm:$0xf]
      %v257 = vld [vmem:[%s225 + $0x30] sm:$0xf]
      %v258 = vld [vmem:[%s225 + $0x34] sm:$0xf]
      %v259 = vld [vmem:[%s225 + $0x38] sm:$0xf]
      %v260 = vld [vmem:[%s225 + $0x3c] sm:$0xf]
      %v261 = vld [vmem:[%s225 + $0x40] sm:$0xf]
      %v262 = vld [vmem:[%s225 + $0x44] sm:$0xf]
      %v263 = vld [vmem:[%s225 + $0x48] sm:$0xf]
      %v264 = vld [vmem:[%s225 + $0x4c] sm:$0xf]
      %v265 = vld [vmem:[%s225 + $0x50] sm:$0xf]
      %v266 = vld [vmem:[%s225 + $0x54] sm:$0xf]
      %v267 = vld [vmem:[%s225 + $0x58] sm:$0xf]
      %v268 = vld [vmem:[%s225 + $0x5c] sm:$0xf]
      %v269 = vld [vmem:[%s225 + $0x60] sm:$0xf]
      %v270 = vld [vmem:[%s225 + $0x64] sm:$0xf]
      %v271 = vld [vmem:[%s225 + $0x68] sm:$0xf]
      %v272 = vld [vmem:[%s225 + $0x6c] sm:$0xf]
      %v273 = vld [vmem:[%s225 + $0x70] sm:$0xf]
      %v274 = vld [vmem:[%s225 + $0x74] sm:$0xf]
      %v275 = vld [vmem:[%s225 + $0x78] sm:$0xf]
      %v276 = vld [vmem:[%s225 + $0x7c] sm:$0xf]
      %v309 = vunpack.c.l.b16 %v245
      %v310 = vunpack.c.l.b16 %v246
      %v311 = vunpack.c.l.b16 %v247
      %v312 = vunpack.c.l.b16 %v248
      %v313 = vunpack.c.l.b16 %v249
      %v314 = vunpack.c.l.b16 %v250
      %v315 = vunpack.c.l.b16 %v251
      %v316 = vunpack.c.l.b16 %v252
      %v317 = vunpack.c.l.b16 %v253
      %v318 = vunpack.c.l.b16 %v254
      %v319 = vunpack.c.l.b16 %v255
      %v320 = vunpack.c.l.b16 %v256
      %v321 = vunpack.c.l.b16 %v257
      %v322 = vunpack.c.l.b16 %v258
      %v323 = vunpack.c.l.b16 %v259
      %v324 = vunpack.c.l.b16 %v260
      %v325 = vunpack.c.l.b16 %v261
      %v326 = vunpack.c.l.b16 %v262
      %v327 = vunpack.c.l.b16 %v263
      %v328 = vunpack.c.l.b16 %v264
      %v329 = vunpack.c.l.b16 %v265
      %v330 = vunpack.c.l.b16 %v266
      %v331 = vunpack.c.l.b16 %v267
      %v332 = vunpack.c.l.b16 %v268
      %v333 = vunpack.c.l.b16 %v269
      %v334 = vunpack.c.l.b16 %v270
      %v335 = vunpack.c.l.b16 %v271
      %v336 = vunpack.c.l.b16 %v272
      %v337 = vunpack.c.l.b16 %v273
      %v338 = vunpack.c.l.b16 %v274
      %v339 = vunpack.c.l.b16 %v275
      %v340 = vunpack.c.l.b16 %v276
      %v341 = vpack.c.b16 %v310, %v309
      %v342 = vpack.c.b16 %v312, %v311
      %v343 = vpack.c.b16 %v314, %v313
      %v344 = vpack.c.b16 %v316, %v315
      %v345 = vpack.c.b16 %v318, %v317
      %v346 = vpack.c.b16 %v320, %v319
      %v347 = vpack.c.b16 %v322, %v321
      %v348 = vpack.c.b16 %v324, %v323
      %v349 = vpack.c.b16 %v326, %v325
      %v350 = vpack.c.b16 %v328, %v327
      %v351 = vpack.c.b16 %v330, %v329
      %v352 = vpack.c.b16 %v332, %v331
      %v353 = vpack.c.b16 %v334, %v333
      %v354 = vpack.c.b16 %v336, %v335
      %v355 = vpack.c.b16 %v338, %v337
      %v356 = vpack.c.b16 %v340, %v339
      %v362 = vunpack.c.l.b16 %v238
      %v363 = vunpack.c.l.b16 %v239
      %v364 = vunpack.c.l.b16 %v240
      %v365 = vunpack.c.l.b16 %v241
      %v366 = vunpack.c.l.b16 %v242
      %v367 = vpack.c.b16 %v363, %v362
      %v368 = vpack.c.b16 %v365, %v364
      %v369 = vpack.c.b16 %v366, %v366
      %vm372 = vcmask 293888
      %v374 = vsel %vm372, %v341, 0
      %v377 = vsel %vm372, %v342, 0
      %v380 = vsel %vm372, %v343, 0
      %v383 = vsel %vm372, %v344, 0
      %v386 = vsel %vm372, %v345, 0
      %v389 = vsel %vm372, %v346, 0
      %v392 = vsel %vm372, %v347, 0
      %v395 = vsel %vm372, %v348, 0
      %v398 = vsel %vm372, %v349, 0
      %v401 = vsel %vm372, %v350, 0
      %v404 = vsel %vm372, %v351, 0
      %v407 = vsel %vm372, %v352, 0
      %v410 = vsel %vm372, %v353, 0
      %v413 = vsel %vm372, %v354, 0
      %v416 = vsel %vm372, %v355, 0
      %v419 = vsel %vm372, %v356, 0
      %vm421 = vcmask 1041408
      %v423 = vsel %vm421, %v369, 0
      %425 = vmatpush.bf16.msra.mxu0 0
      %426 = vmatpush.bf16.msra.mxu0 0
      %427 = vmatpush.bf16.msra.mxu0 0
      %428 = vmatpush.bf16.msra.mxu0 0
      %429 = vmatpush.bf16.msra.mxu0 0
      %430 = vmatpush.bf16.msra.mxu0 %v423
      %431 = vmatpush.bf16.msra.mxu0 %v368
      %432 = vmatpush.bf16.msra.mxu0 %v367
      %433 = vmatmul.bf16.gmra.mxu0 %v374
      %v434 = vpop.f32.mrf.mxu0
      %v435 = vadd.f32 0.0, %v434
      %v436 = vpop.f32.mrf.mxu0
      %v437 = vadd.f32 0.0, %v436
      %438 = vmatmul.bf16.gmra.mxu0 %v377
      %v439 = vpop.f32.mrf.mxu0
      %v440 = vadd.f32 0.0, %v439
      %v441 = vpop.f32.mrf.mxu0
      %v442 = vadd.f32 0.0, %v441
      %443 = vmatmul.bf16.gmra.mxu0 %v380
      %v444 = vpop.f32.mrf.mxu0
      %v445 = vadd.f32 0.0, %v444
      %v446 = vpop.f32.mrf.mxu0
      %v447 = vadd.f32 0.0, %v446
      %448 = vmatmul.bf16.gmra.mxu0 %v383
      %v449 = vpop.f32.mrf.mxu0
      %v450 = vadd.f32 0.0, %v449
      %v451 = vpop.f32.mrf.mxu0
      %v452 = vadd.f32 0.0, %v451
      %453 = vmatmul.bf16.gmra.mxu0 %v386
      %v454 = vpop.f32.mrf.mxu0
      %v455 = vadd.f32 0.0, %v454
      %v456 = vpop.f32.mrf.mxu0
      %v457 = vadd.f32 0.0, %v456
      %458 = vmatmul.bf16.gmra.mxu0 %v389
      %v459 = vpop.f32.mrf.mxu0
      %v460 = vadd.f32 0.0, %v459
      %v461 = vpop.f32.mrf.mxu0
      %v462 = vadd.f32 0.0, %v461
      %463 = vmatmul.bf16.gmra.mxu0 %v392
      %v464 = vpop.f32.mrf.mxu0
      %v465 = vadd.f32 0.0, %v464
      %v466 = vpop.f32.mrf.mxu0
      %v467 = vadd.f32 0.0, %v466
      %468 = vmatmul.bf16.gmra.mxu0 %v395
      %v469 = vpop.f32.mrf.mxu0
      %v470 = vadd.f32 0.0, %v469
      %v471 = vpop.f32.mrf.mxu0
      %v472 = vadd.f32 0.0, %v471
      %473 = vmatmul.bf16.gmra.mxu0 %v398
      %v474 = vpop.f32.mrf.mxu0
      %v475 = vadd.f32 0.0, %v474
      %v476 = vpop.f32.mrf.mxu0
      %v477 = vadd.f32 0.0, %v476
      %478 = vmatmul.bf16.gmra.mxu0 %v401
      %v479 = vpop.f32.mrf.mxu0
      %v480 = vadd.f32 0.0, %v479
      %v481 = vpop.f32.mrf.mxu0
      %v482 = vadd.f32 0.0, %v481
      %483 = vmatmul.bf16.gmra.mxu0 %v404
      %v484 = vpop.f32.mrf.mxu0
      %v485 = vadd.f32 0.0, %v484
      %v486 = vpop.f32.mrf.mxu0
      %v487 = vadd.f32 0.0, %v486
      %488 = vmatmul.bf16.gmra.mxu0 %v407
      %v489 = vpop.f32.mrf.mxu0
      %v490 = vadd.f32 0.0, %v489
      %v491 = vpop.f32.mrf.mxu0
      %v492 = vadd.f32 0.0, %v491
      %493 = vmatmul.bf16.gmra.mxu0 %v410
      %v494 = vpop.f32.mrf.mxu0
      %v495 = vadd.f32 0.0, %v494
      %v496 = vpop.f32.mrf.mxu0
      %v497 = vadd.f32 0.0, %v496
      %498 = vmatmul.bf16.gmra.mxu0 %v413
      %v499 = vpop.f32.mrf.mxu0
      %v500 = vadd.f32 0.0, %v499
      %v501 = vpop.f32.mrf.mxu0
      %v502 = vadd.f32 0.0, %v501
      %503 = vmatmul.bf16.gmra.mxu0 %v416
      %v504 = vpop.f32.mrf.mxu0
      %v505 = vadd.f32 0.0, %v504
      %v506 = vpop.f32.mrf.mxu0
      %v507 = vadd.f32 0.0, %v506
      %508 = vmatmul.bf16.gmra.mxu0 %v419
      %v509 = vpop.f32.mrf.mxu0
      %v510 = vadd.f32 0.0, %v509
      %v511 = vpop.f32.mrf.mxu0
      %v512 = vadd.f32 0.0, %v511
      %513 = vdwg.mxu0
      %v515 = vperm.slane %v243, 0
      %v517 = vmul.f32 %v435, %v515
      %v518 = vmul.f32 %v437, %v515
      %v519 = vmul.f32 %v440, %v515
      %v520 = vmul.f32 %v442, %v515
      %v521 = vmul.f32 %v445, %v515
      %v522 = vmul.f32 %v447, %v515
      %v523 = vmul.f32 %v450, %v515
      %v524 = vmul.f32 %v452, %v515
      %v525 = vmul.f32 %v455, %v515
      %v526 = vmul.f32 %v457, %v515
      %v527 = vmul.f32 %v460, %v515
      %v528 = vmul.f32 %v462, %v515
      %v529 = vmul.f32 %v465, %v515
      %v530 = vmul.f32 %v467, %v515
      %v531 = vmul.f32 %v470, %v515
      %v532 = vmul.f32 %v472, %v515
      %v533 = vmul.f32 %v475, %v515
      %v534 = vmul.f32 %v477, %v515
      %v535 = vmul.f32 %v480, %v515
      %v536 = vmul.f32 %v482, %v515
      %v537 = vmul.f32 %v485, %v515
      %v538 = vmul.f32 %v487, %v515
      %v539 = vmul.f32 %v490, %v515
      %v540 = vmul.f32 %v492, %v515
      %v541 = vmul.f32 %v495, %v515
      %v542 = vmul.f32 %v497, %v515
      %v543 = vmul.f32 %v500, %v515
      %v544 = vmul.f32 %v502, %v515
      %v545 = vmul.f32 %v505, %v515
      %v546 = vmul.f32 %v507, %v515
      %v547 = vmul.f32 %v510, %v515
      %v548 = vmul.f32 %v512, %v515
      %v550 = vperm.slane %v244, 0
      %v552 = vadd.f32 %v517, %v550
      %v553 = vadd.f32 %v518, %v550
      %v554 = vadd.f32 %v519, %v550
      %v555 = vadd.f32 %v520, %v550
      %v556 = vadd.f32 %v521, %v550
      %v557 = vadd.f32 %v522, %v550
      %v558 = vadd.f32 %v523, %v550
      %v559 = vadd.f32 %v524, %v550
      %v560 = vadd.f32 %v525, %v550
      %v561 = vadd.f32 %v526, %v550
      %v562 = vadd.f32 %v527, %v550
      %v563 = vadd.f32 %v528, %v550
      %v564 = vadd.f32 %v529, %v550
      %v565 = vadd.f32 %v530, %v550
      %v566 = vadd.f32 %v531, %v550
      %v567 = vadd.f32 %v532, %v550
      %v568 = vadd.f32 %v533, %v550
      %v569 = vadd.f32 %v534, %v550
      %v570 = vadd.f32 %v535, %v550
      %v571 = vadd.f32 %v536, %v550
      %v572 = vadd.f32 %v537, %v550
      %v573 = vadd.f32 %v538, %v550
      %v574 = vadd.f32 %v539, %v550
      %v575 = vadd.f32 %v540, %v550
      %v576 = vadd.f32 %v541, %v550
      %v577 = vadd.f32 %v542, %v550
      %v578 = vadd.f32 %v543, %v550
      %v579 = vadd.f32 %v544, %v550
      %v580 = vadd.f32 %v545, %v550
      %v581 = vadd.f32 %v546, %v550
      %v582 = vadd.f32 %v547, %v550
      %v583 = vadd.f32 %v548, %v550
      %584 = vxpose.xlu0.b32.start [1/16] %v552, 128
      %585 = vxpose.xlu0.b32.cont [2/16] %v553, 128
      %586 = vxpose.xlu0.b32.cont [3/16] %v554, 128
      %587 = vxpose.xlu0.b32.cont [4/16] %v555, 128
      %588 = vxpose.xlu0.b32.cont [5/16] %v556, 128
      %589 = vxpose.xlu0.b32.cont [6/16] %v557, 128
      %590 = vxpose.xlu0.b32.cont [7/16] %v558, 128
      %591 = vxpose.xlu0.b32.cont [8/16] %v559, 128
      %592 = vxpose.xlu0.b32.cont [9/16] %v560, 128
      %593 = vxpose.xlu0.b32.cont [10/16] %v561, 128
      %594 = vxpose.xlu0.b32.cont [11/16] %v562, 128
      %595 = vxpose.xlu0.b32.cont [12/16] %v563, 128
      %596 = vxpose.xlu0.b32.cont [13/16] %v564, 128
      %597 = vxpose.xlu0.b32.cont [14/16] %v565, 128
      %598 = vxpose.xlu0.b32.cont [15/16] %v566, 128
      %599 = vxpose.xlu0.b32.end [16/16] %v567, 128
      %v600 = vpop.trf.xlu0
      %v601 = vpop.trf.xlu0
      %v602 = vpop.trf.xlu0
      %v603 = vpop.trf.xlu0
      %v604 = vpop.trf.xlu0
      %v605 = vpop.trf.xlu0
      %v606 = vpop.trf.xlu0
      %v607 = vpop.trf.xlu0
      %v608 = vpop.trf.xlu0
      %v609 = vpop.trf.xlu0
      %v610 = vpop.trf.xlu0
      %v611 = vpop.trf.xlu0
      %v612 = vpop.trf.xlu0
      %v613 = vpop.trf.xlu0
      %v614 = vpop.trf.xlu0
      %v615 = vpop.trf.xlu0
      %616 = vxpose.xlu0.b32.start [1/16] %v568, 128
      %617 = vxpose.xlu0.b32.cont [2/16] %v569, 128
      %618 = vxpose.xlu0.b32.cont [3/16] %v570, 128
      %619 = vxpose.xlu0.b32.cont [4/16] %v571, 128
      %620 = vxpose.xlu0.b32.cont [5/16] %v572, 128
      %621 = vxpose.xlu0.b32.cont [6/16] %v573, 128
      %622 = vxpose.xlu0.b32.cont [7/16] %v574, 128
      %623 = vxpose.xlu0.b32.cont [8/16] %v575, 128
      %624 = vxpose.xlu0.b32.cont [9/16] %v576, 128
      %625 = vxpose.xlu0.b32.cont [10/16] %v577, 128
      %626 = vxpose.xlu0.b32.cont [11/16] %v578, 128
      %627 = vxpose.xlu0.b32.cont [12/16] %v579, 128
      %628 = vxpose.xlu0.b32.cont [13/16] %v580, 128
      %629 = vxpose.xlu0.b32.cont [14/16] %v581, 128
      %630 = vxpose.xlu0.b32.cont [15/16] %v582, 128
      %631 = vxpose.xlu0.b32.end [16/16] %v583, 128
      %v632 = vpop.trf.xlu0
      %v633 = vpop.trf.xlu0
      %v634 = vpop.trf.xlu0
      %v635 = vpop.trf.xlu0
      %v636 = vpop.trf.xlu0
      %v637 = vpop.trf.xlu0
      %v638 = vpop.trf.xlu0
      %v639 = vpop.trf.xlu0
      %v640 = vpop.trf.xlu0
      %v641 = vpop.trf.xlu0
      %v642 = vpop.trf.xlu0
      %v643 = vpop.trf.xlu0
      %v644 = vpop.trf.xlu0
      %v645 = vpop.trf.xlu0
      %v646 = vpop.trf.xlu0
      %v647 = vpop.trf.xlu0
      %648 = vst [vmem:[%s235] sm:$0xff] %v600
      %649 = vst [vmem:[%s235 + $0x8] sm:$0xff] %v632
      %s650 = smul.u32 2, %s20
      %p651 = scmp.lt.s32.totalorder %s19, 1
      %s652 = scalar_select %p651, %s19, 1
      %p653 = scmp.lt.s32.totalorder %s650, 1
      %s654 = scalar_select %p653, %s650, 1
      %s655 = smul.addr %s652, 2
      %s656 = sadd.s32 %s654, %s655
      %s657 = smul.addr %s656, 8
      %s658 = scalar_lea.vmem %s4, %s657
      // Predicated region
      $region37: #{conv_bn_forward.3} parent=35 // pred_check
        %p659 = pneg %p138
      $region38: #{conv_bn_forward.3} parent=35 // pred_check_branch
        %661 = sbr.rel (%p659) target = $region40
      $region39: #{conv_bn_forward.3} parent=35 // pred_region
        %s662 = smul.u32 2, %s20
      $region40: #{conv_bn_forward.3} parent=35 // pred_fallthru
        _
    $region36: #{conv_bn_forward.3} parent=5 // pred_fallthru
      _
    %p663 = scmp.le.s32.totalorder 2, %s10
    // Predicated region
    $region41: #{conv_bn_forward.3} parent=5 // pred_check
      %p664 = pneg %p663
    $region42: #{conv_bn_forward.3} parent=5 // pred_check_branch
      %666 = sbr.rel (%p664) target = $region44
    $region43: #{conv_bn_forward.3} parent=5 // pred_region
      %s667 = ssub.s32 %s10, 2
      // Predicated region
      $region45: #{conv_bn_forward.3} parent=43 // pred_check
        %p668 = pneg %p144
      $region46: #{conv_bn_forward.3} parent=43 // pred_check_branch
        %670 = sbr.rel (%p668) target = $region48
      $region47: #{conv_bn_forward.3} parent=43 // pred_region
        %s671 = smul.u32 2, %s22
        %p672 = scmp.lt.s32.totalorder %s21, 1
        %s673 = scalar_select %p672, %s21, 1
        %p674 = scmp.lt.s32.totalorder %s671, 1
        %s675 = scalar_select %p674, %s671, 1
        %s676 = smul.addr %s673, 2
        %s677 = sadd.s32 %s675, %s676
        %s678 = smul.addr %s677, 8
        %s679 = scalar_lea.vmem %s4, %s678
      $region48: #{conv_bn_forward.3} parent=43 // pred_fallthru
        _
    $region44: #{conv_bn_forward.3} parent=5 // pred_fallthru
      _
  $region6: #{conv_bn_forward.3} parent=0 // loop_footer
    %s14 = sadd.s32 1, %s10
  $region7: #{conv_bn_forward.3} parent=0 // loop_footer_branch
    %9 = sbr.rel target = $region3
  $region8: #{conv_bn_forward.3} parent=0 // loop_exit
    _

// kernel: conv_bn_forward.2
$region0: #{conv_bn_forward.2}
  #allocation0 [shape = 'u32[]', space=smem, size = 0x4, offset = 0x4, fixed_abs, tag = 'smem constant byte address 0x4 - core index']
  #allocation1 [shape = 'u32[72,128]{1,0:T(1,128)}', space=vmem, size = 0x9000, scoped, tag = 'internal scratch']
  %s0 = inlined_call_operand.vmem [shape: bf16[2,256,36], index: 0, kind: input, shape index: {}]
  %s1 = inlined_call_operand.vmem [shape: bf16[36,128], index: 1, kind: input, shape index: {}]
  %s2 = inlined_call_operand.vmem [shape: f32[2,1,2,128], index: 2, kind: output, shape index: {}]
  %s3 = sld [smem:[#allocation0]]
  $region41: #{conv_bn_forward.2} parent=0
    _
  %s5 = ssub.s32 1, %s3
  %s6 = scalar_select 0, %s5, %s3
  loop: start=0, step=1, limit=4
  $region2: #{conv_bn_forward.2} parent=0 // loop_pre_header
    _
  $region3: #{conv_bn_forward.2} parent=0 // loop_header
    %s8 = sphi 0, %s12
    %p9 = scmp.ge.s32.totalorder %s8, 4
    %s15 = sphi 0, %s27
    %s16 = sphi 0, %s23
    %s17 = sphi 0, %s15
    %s18 = sphi 0, %s16
    %s19 = sphi 0, %s17
    %s20 = sphi 0, %s18
    %s32 = sphi 0, %s34
    %s35 = sphi 0, %s32
    %s36 = sphi 0, %s35
    %s52 = sphi 0, %s36
    %s56 = sphi 0, %s56
    %s58 = sphi 0, %s56
    %s59 = sphi 0, %s58
    %s73 = sphi 0, %s59
    %s81 = sphi 0, %s83
    %s84 = sphi 0, %s81
    %s85 = sphi 0, %s84
    %s101 = sphi 0, %s85
  $region4: #{conv_bn_forward.2} parent=0 // loop_header_branch
    %11 = sbr.rel (%p9) target = $region8
  $region5: #{conv_bn_forward.2} parent=0 // loop_body
    %s13 = ssub.s32 %s8, 1
    %s14 = ssub.s32 %s8, 2
    %s21 = sadd.s32 1, %s16
    %p22 = scmp.ge.s32.totalorder %s21, 1
    %s23 = scalar_select %p22, 0, %s21
    %s24 = sadd.s32 1, %s15
    %s25 = scalar_select %p22, %s24, %s15
    %p26 = scmp.ge.s32.totalorder %s25, 2
    %s27 = scalar_select %p26, 0, %s25
    %s28 = ssub.s32 %s15, %s27
    %s29 = ssub.s32 %s16, %s23
    %s30 = sor.u32 %s28, %s29
    %p31 = scmp.eq.s32.totalorder %s30, 0
    %s33 = sadd.s32 %s32, 1
    %s34 = scalar_select %p31, %s32, %s33
    %p37 = pneg %p31
    %p38 = scmp.eq.s32.totalorder %s8, 1
    %p39 = por %p37, %p38
    %p40 = scmp.ne.s32.totalorder %s32, %s35
    %p41 = scmp.eq.s32.totalorder %s8, 0
    %p42 = por %p40, %p41
    %p43 = scmp.ne.s32.totalorder %s32, %s35
    %p44 = scmp.eq.s32.totalorder %s13, 1
    %p45 = por %p43, %p44
    %p46 = scmp.ne.s32.totalorder %s35, %s36
    %p47 = scmp.eq.s32.totalorder %s13, 0
    %p48 = por %p46, %p47
    %p49 = scmp.ne.s32.totalorder %s35, %s36
    %p50 = scmp.eq.s32.totalorder %s14, 1
    %p51 = por %p49, %p50
    %p53 = scmp.ne.s32.totalorder %s36, %s52
    %p54 = scmp.eq.s32.totalorder %s14, 0
    %p55 = por %p53, %p54
    %s57 = sadd.s32 %s56, 1
    %p60 = scmp.eq.s32.totalorder %s8, 1
    %p61 = scmp.ne.s32.totalorder %s56, %s58
    %p62 = scmp.eq.s32.totalorder %s8, 0
    %p63 = por %p61, %p62
    %p64 = scmp.ne.s32.totalorder %s56, %s58
    %p65 = scmp.eq.s32.totalorder %s13, 1
    %p66 = por %p64, %p65
    %p67 = scmp.ne.s32.totalorder %s58, %s59
    %p68 = scmp.eq.s32.totalorder %s13, 0
    %p69 = por %p67, %p68
    %p70 = scmp.ne.s32.totalorder %s58, %s59
    %p71 = scmp.eq.s32.totalorder %s14, 1
    %p72 = por %p70, %p71
    %p74 = scmp.ne.s32.totalorder %s59, %s73
    %p75 = scmp.eq.s32.totalorder %s14, 0
    %p76 = por %p74, %p75
    %s77 = ssub.s32 %s15, %s27
    %s78 = ssub.s32 %s16, %s23
    %s79 = sor.u32 %s77, %s78
    %p80 = scmp.eq.s32.totalorder %s79, 0
    %s82 = sadd.s32 %s81, 1
    %s83 = scalar_select %p80, %s81, %s82
    %p86 = pneg %p80
    %p87 = scmp.eq.s32.totalorder %s8, 1
    %p88 = por %p86, %p87
    %p89 = scmp.ne.s32.totalorder %s81, %s84
    %p90 = scmp.eq.s32.totalorder %s8, 0
    %p91 = por %p89, %p90
    %p92 = scmp.ne.s32.totalorder %s81, %s84
    %p93 = scmp.eq.s32.totalorder %s13, 1
    %p94 = por %p92, %p93
    %p95 = scmp.ne.s32.totalorder %s84, %s85
    %p96 = scmp.eq.s32.totalorder %s13, 0
    %p97 = por %p95, %p96
    %p98 = scmp.ne.s32.totalorder %s84, %s85
    %p99 = scmp.eq.s32.totalorder %s14, 1
    %p100 = por %p98, %p99
    %p102 = scmp.ne.s32.totalorder %s85, %s101
    %p103 = scmp.eq.s32.totalorder %s14, 0
    %p104 = por %p102, %p103
    %p105 = scmp.le.s32.totalorder 1, %s8
    %p106 = scmp.lt.s32.totalorder %s8, 3
    %p107 = pnand %p105, %p106
    %p108 = pneg %p107
    // Predicated region
    $region9: #{conv_bn_forward.2} parent=5 // pred_check
      _
    $region10: #{conv_bn_forward.2} parent=5 // pred_check_branch
      %110 = sbr.rel (%p107) target = $region12
    $region11: #{conv_bn_forward.2} parent=5 // pred_region
      %s111 = ssub.s32 %s8, 1
      // Predicated region
      $region13: #{conv_bn_forward.2} parent=11 // pred_check
        %p112 = pneg %p69
      $region14: #{conv_bn_forward.2} parent=11 // pred_check_branch
        %114 = sbr.rel (%p112) target = $region16
      $region15: #{conv_bn_forward.2} parent=11 // pred_region
        _
      $region16: #{conv_bn_forward.2} parent=11 // pred_fallthru
        _
    $region12: #{conv_bn_forward.2} parent=5 // pred_fallthru
      _
    %p115 = scmp.lt.s32.totalorder %s8, 2
    // Predicated region
    $region17: #{conv_bn_forward.2} parent=5 // pred_check
      %p116 = pneg %p115
    $region18: #{conv_bn_forward.2} parent=5 // pred_check_branch
      %118 = sbr.rel (%p116) target = $region20
    $region19: #{conv_bn_forward.2} parent=5 // pred_region
      // Predicated region
      $region21: #{conv_bn_forward.2} parent=19 // pred_check
        %p119 = pneg %p42
      $region22: #{conv_bn_forward.2} parent=19 // pred_check_branch
        %121 = sbr.rel (%p119) target = $region24
      $region23: #{conv_bn_forward.2} parent=19 // pred_region
        %s122 = smul.u32 32, %s16
        %p123 = scmp.lt.s32.totalorder %s15, 1
        %s124 = scalar_select %p123, %s15, 1
        %p125 = scmp.lt.s32.totalorder %s122, 31
        %s126 = scalar_select %p125, %s122, 31
        %s127 = smul.addr %s124, 32
        %s128 = sadd.s32 %s126, %s127
        %s129 = smul.addr %s128, 4
        %s130 = scalar_lea.vmem %s0, %s129
        %s131 = smul.u32 32, %s16
      $region24: #{conv_bn_forward.2} parent=19 // pred_fallthru
        _
    $region20: #{conv_bn_forward.2} parent=5 // pred_fallthru
      _
    %p132 = scmp.le.s32.totalorder 1, %s8
    %p133 = scmp.lt.s32.totalorder %s8, 3
    %p134 = pnand %p132, %p133
    %p135 = pneg %p134
    // Predicated region
    $region25: #{conv_bn_forward.2} parent=5 // pred_check
      _
    $region26: #{conv_bn_forward.2} parent=5 // pred_check_branch
      %137 = sbr.rel (%p134) target = $region28
    $region27: #{conv_bn_forward.2} parent=5 // pred_region
      %s138 = ssub.s32 %s8, 1
      %s139 = smul.u32 32, %s18
      %p140 = scmp.lt.s32.totalorder %s17, 1
      %s141 = scalar_select %p140, %s17, 1
      %p142 = scmp.lt.s32.totalorder %s139, 31
      %s143 = scalar_select %p142, %s139, 31
      %s144 = smul.addr %s141, 32
      %s145 = sadd.s32 %s143, %s144
      %s146 = smul.addr %s145, 4
      %s147 = scalar_lea.vmem %s0, %s146
      %p148 = pneg %p48
      %p149 = pneg %p45
      %p150 = pneg %p69
      %p151 = pneg %p66
      %p152 = pneg %p97
      %p153 = pneg %p94
      %p154 = scmp.lt.s32.totalorder %s17, 1
      %s155 = scalar_select %p154, %s17, 1
      %p156 = scmp.lt.s32.totalorder %s18, 0
      %s157 = scalar_select %p156, %s18, 0
      %s158 = sadd.s32 %s157, %s155
      %s159 = smul.addr %s158, 2
      %s160 = scalar_lea.vmem %s2, %s159
      %s161 = smul.u32 32, %s18
      %p162 = scmp.lt.s32.totalorder %s17, 1
      %s163 = scalar_select %p162, %s17, 1
      %p164 = scmp.lt.s32.totalorder %s161, 31
      %s165 = scalar_select %p164, %s161, 31
      %s166 = smul.addr %s163, 32
      %s167 = sadd.s32 %s165, %s166
      %s168 = smul.addr %s167, 4
      %s169 = scalar_lea.vmem %s0, %s168
      %s170 = smul.u32 32, %s18
      %p171 = scmp.lt.s32.totalorder %s17, 1
      %s172 = scalar_select %p171, %s17, 1
      %p173 = scmp.lt.s32.totalorder %s18, 0
      %s174 = scalar_select %p173, %s18, 0
      %s175 = sadd.s32 %s174, %s172
      %s176 = smul.addr %s175, 2
      %s177 = scalar_lea.vmem %s2, %s176
      %v179 = vld [vmem:[%s1] sm:$0xf]
      %v180 = vld [vmem:[%s1 + $0x4] sm:$0xf]
      %v181 = vld [vmem:[%s1 + $0x8] sm:$0xf]
      %v182 = vld [vmem:[%s1 + $0xc] sm:$0xf]
      %v183 = vld [vmem:[%s1 + $0x10] sm:$0x3]
      %v184 = vld [vmem:[%s169] sm:$0xf]
      %v185 = vld [vmem:[%s169 + $0x4] sm:$0xf]
      %v186 = vld [vmem:[%s169 + $0x8] sm:$0xf]
      %v187 = vld [vmem:[%s169 + $0xc] sm:$0xf]
      %v188 = vld [vmem:[%s169 + $0x10] sm:$0xf]
      %v189 = vld [vmem:[%s169 + $0x14] sm:$0xf]
      %v190 = vld [vmem:[%s169 + $0x18] sm:$0xf]
      %v191 = vld [vmem:[%s169 + $0x1c] sm:$0xf]
      %v192 = vld [vmem:[%s169 + $0x20] sm:$0xf]
      %v193 = vld [vmem:[%s169 + $0x24] sm:$0xf]
      %v194 = vld [vmem:[%s169 + $0x28] sm:$0xf]
      %v195 = vld [vmem:[%s169 + $0x2c] sm:$0xf]
      %v196 = vld [vmem:[%s169 + $0x30] sm:$0xf]
      %v197 = vld [vmem:[%s169 + $0x34] sm:$0xf]
      %v198 = vld [vmem:[%s169 + $0x38] sm:$0xf]
      %v199 = vld [vmem:[%s169 + $0x3c] sm:$0xf]
      %v200 = vld [vmem:[%s169 + $0x40] sm:$0xf]
      %v201 = vld [vmem:[%s169 + $0x44] sm:$0xf]
      %v202 = vld [vmem:[%s169 + $0x48] sm:$0xf]
      %v203 = vld [vmem:[%s169 + $0x4c] sm:$0xf]
      %v204 = vld [vmem:[%s169 + $0x50] sm:$0xf]
      %v205 = vld [vmem:[%s169 + $0x54] sm:$0xf]
      %v206 = vld [vmem:[%s169 + $0x58] sm:$0xf]
      %v207 = vld [vmem:[%s169 + $0x5c] sm:$0xf]
      %v208 = vld [vmem:[%s169 + $0x60] sm:$0xf]
      %v209 = vld [vmem:[%s169 + $0x64] sm:$0xf]
      %v210 = vld [vmem:[%s169 + $0x68] sm:$0xf]
      %v211 = vld [vmem:[%s169 + $0x6c] sm:$0xf]
      %v212 = vld [vmem:[%s169 + $0x70] sm:$0xf]
      %v213 = vld [vmem:[%s169 + $0x74] sm:$0xf]
      %v214 = vld [vmem:[%s169 + $0x78] sm:$0xf]
      %v215 = vld [vmem:[%s169 + $0x7c] sm:$0xf]
      %v248 = vunpack.c.l.b16 %v184
      %v249 = vunpack.c.l.b16 %v185
      %v250 = vunpack.c.l.b16 %v186
      %v251 = vunpack.c.l.b16 %v187
      %v252 = vunpack.c.l.b16 %v188
      %v253 = vunpack.c.l.b16 %v189
      %v254 = vunpack.c.l.b16 %v190
      %v255 = vunpack.c.l.b16 %v191
      %v256 = vunpack.c.l.b16 %v192
      %v257 = vunpack.c.l.b16 %v193
      %v258 = vunpack.c.l.b16 %v194
      %v259 = vunpack.c.l.b16 %v195
      %v260 = vunpack.c.l.b16 %v196
      %v261 = vunpack.c.l.b16 %v197
      %v262 = vunpack.c.l.b16 %v198
      %v263 = vunpack.c.l.b16 %v199
      %v264 = vunpack.c.l.b16 %v200
      %v265 = vunpack.c.l.b16 %v201
      %v266 = vunpack.c.l.b16 %v202
      %v267 = vunpack.c.l.b16 %v203
      %v268 = vunpack.c.l.b16 %v204
      %v269 = vunpack.c.l.b16 %v205
      %v270 = vunpack.c.l.b16 %v206
      %v271 = vunpack.c.l.b16 %v207
      %v272 = vunpack.c.l.b16 %v208
      %v273 = vunpack.c.l.b16 %v209
      %v274 = vunpack.c.l.b16 %v210
      %v275 = vunpack.c.l.b16 %v211
      %v276 = vunpack.c.l.b16 %v212
      %v277 = vunpack.c.l.b16 %v213
      %v278 = vunpack.c.l.b16 %v214
      %v279 = vunpack.c.l.b16 %v215
      %v280 = vpack.c.b16 %v249, %v248
      %v281 = vpack.c.b16 %v251, %v250
      %v282 = vpack.c.b16 %v253, %v252
      %v283 = vpack.c.b16 %v255, %v254
      %v284 = vpack.c.b16 %v257, %v256
      %v285 = vpack.c.b16 %v259, %v258
      %v286 = vpack.c.b16 %v261, %v260
      %v287 = vpack.c.b16 %v263, %v262
      %v288 = vpack.c.b16 %v265, %v264
      %v289 = vpack.c.b16 %v267, %v266
      %v290 = vpack.c.b16 %v269, %v268
      %v291 = vpack.c.b16 %v271, %v270
      %v292 = vpack.c.b16 %v273, %v272
      %v293 = vpack.c.b16 %v275, %v274
      %v294 = vpack.c.b16 %v277, %v276
      %v295 = vpack.c.b16 %v279, %v278
      %v301 = vunpack.c.l.b16 %v179
      %v302 = vunpack.c.l.b16 %v180
      %v303 = vunpack.c.l.b16 %v181
      %v304 = vunpack.c.l.b16 %v182
      %v305 = vunpack.c.l.b16 %v183
      %v306 = vpack.c.b16 %v302, %v301
      %v307 = vpack.c.b16 %v304, %v303
      %v308 = vpack.c.b16 %v305, %v305
      %vm311 = vcmask 293888
      %v313 = vsel %vm311, %v280, 0
      %v316 = vsel %vm311, %v281, 0
      %v319 = vsel %vm311, %v282, 0
      %v322 = vsel %vm311, %v283, 0
      %v325 = vsel %vm311, %v284, 0
      %v328 = vsel %vm311, %v285, 0
      %v331 = vsel %vm311, %v286, 0
      %v334 = vsel %vm311, %v287, 0
      %v337 = vsel %vm311, %v288, 0
      %v340 = vsel %vm311, %v289, 0
      %v343 = vsel %vm311, %v290, 0
      %v346 = vsel %vm311, %v291, 0
      %v349 = vsel %vm311, %v292, 0
      %v352 = vsel %vm311, %v293, 0
      %v355 = vsel %vm311, %v294, 0
      %v358 = vsel %vm311, %v295, 0
      %vm360 = vcmask 1041408
      %v362 = vsel %vm360, %v308, 0
      %364 = vmatpush.bf16.msra.mxu0 0
      %365 = vmatpush.bf16.msra.mxu0 0
      %366 = vmatpush.bf16.msra.mxu0 0
      %367 = vmatpush.bf16.msra.mxu0 0
      %368 = vmatpush.bf16.msra.mxu0 0
      %369 = vmatpush.bf16.msra.mxu0 %v362
      %370 = vmatpush.bf16.msra.mxu0 %v307
      %371 = vmatpush.bf16.msra.mxu0 %v306
      %372 = vmatmul.bf16.gmra.mxu0 %v313
      %v373 = vpop.f32.mrf.mxu0
      %v374 = vadd.f32 0.0, %v373
      %v375 = vpop.f32.mrf.mxu0
      %v376 = vadd.f32 0.0, %v375
      %377 = vmatmul.bf16.gmra.mxu0 %v316
      %v378 = vpop.f32.mrf.mxu0
      %v379 = vadd.f32 0.0, %v378
      %v380 = vpop.f32.mrf.mxu0
      %v381 = vadd.f32 0.0, %v380
      %382 = vmatmul.bf16.gmra.mxu0 %v319
      %v383 = vpop.f32.mrf.mxu0
      %v384 = vadd.f32 0.0, %v383
      %v385 = vpop.f32.mrf.mxu0
      %v386 = vadd.f32 0.0, %v385
      %387 = vmatmul.bf16.gmra.mxu0 %v322
      %v388 = vpop.f32.mrf.mxu0
      %v389 = vadd.f32 0.0, %v388
      %v390 = vpop.f32.mrf.mxu0
      %v391 = vadd.f32 0.0, %v390
      %392 = vmatmul.bf16.gmra.mxu0 %v325
      %v393 = vpop.f32.mrf.mxu0
      %v394 = vadd.f32 0.0, %v393
      %v395 = vpop.f32.mrf.mxu0
      %v396 = vadd.f32 0.0, %v395
      %397 = vmatmul.bf16.gmra.mxu0 %v328
      %v398 = vpop.f32.mrf.mxu0
      %v399 = vadd.f32 0.0, %v398
      %v400 = vpop.f32.mrf.mxu0
      %v401 = vadd.f32 0.0, %v400
      %402 = vmatmul.bf16.gmra.mxu0 %v331
      %v403 = vpop.f32.mrf.mxu0
      %v404 = vadd.f32 0.0, %v403
      %v405 = vpop.f32.mrf.mxu0
      %v406 = vadd.f32 0.0, %v405
      %407 = vmatmul.bf16.gmra.mxu0 %v334
      %v408 = vpop.f32.mrf.mxu0
      %v409 = vadd.f32 0.0, %v408
      %v410 = vpop.f32.mrf.mxu0
      %v411 = vadd.f32 0.0, %v410
      %412 = vmatmul.bf16.gmra.mxu0 %v337
      %v413 = vpop.f32.mrf.mxu0
      %v414 = vadd.f32 0.0, %v413
      %v415 = vpop.f32.mrf.mxu0
      %v416 = vadd.f32 0.0, %v415
      %417 = vmatmul.bf16.gmra.mxu0 %v340
      %v418 = vpop.f32.mrf.mxu0
      %v419 = vadd.f32 0.0, %v418
      %v420 = vpop.f32.mrf.mxu0
      %v421 = vadd.f32 0.0, %v420
      %422 = vmatmul.bf16.gmra.mxu0 %v343
      %v423 = vpop.f32.mrf.mxu0
      %v424 = vadd.f32 0.0, %v423
      %v425 = vpop.f32.mrf.mxu0
      %v426 = vadd.f32 0.0, %v425
      %427 = vmatmul.bf16.gmra.mxu0 %v346
      %v428 = vpop.f32.mrf.mxu0
      %v429 = vadd.f32 0.0, %v428
      %v430 = vpop.f32.mrf.mxu0
      %v431 = vadd.f32 0.0, %v430
      %432 = vmatmul.bf16.gmra.mxu0 %v349
      %v433 = vpop.f32.mrf.mxu0
      %v434 = vadd.f32 0.0, %v433
      %v435 = vpop.f32.mrf.mxu0
      %v436 = vadd.f32 0.0, %v435
      %437 = vmatmul.bf16.gmra.mxu0 %v352
      %v438 = vpop.f32.mrf.mxu0
      %v439 = vadd.f32 0.0, %v438
      %v440 = vpop.f32.mrf.mxu0
      %v441 = vadd.f32 0.0, %v440
      %442 = vmatmul.bf16.gmra.mxu0 %v355
      %v443 = vpop.f32.mrf.mxu0
      %v444 = vadd.f32 0.0, %v443
      %v445 = vpop.f32.mrf.mxu0
      %v446 = vadd.f32 0.0, %v445
      %447 = vmatmul.bf16.gmra.mxu0 %v358
      %v448 = vpop.f32.mrf.mxu0
      %v449 = vadd.f32 0.0, %v448
      %v450 = vpop.f32.mrf.mxu0
      %v451 = vadd.f32 0.0, %v450
      %452 = vdwg.mxu0
      %v453 = vadd.f32 %v374, %v376
      %v454 = vadd.f32 %v453, %v379
      %v455 = vadd.f32 %v454, %v381
      %v456 = vadd.f32 %v455, %v384
      %v457 = vadd.f32 %v456, %v386
      %v458 = vadd.f32 %v457, %v389
      %v459 = vadd.f32 %v458, %v391
      %v460 = vadd.f32 %v459, %v394
      %v461 = vadd.f32 %v460, %v396
      %v462 = vadd.f32 %v461, %v399
      %v463 = vadd.f32 %v462, %v401
      %v464 = vadd.f32 %v463, %v404
      %v465 = vadd.f32 %v464, %v406
      %v466 = vadd.f32 %v465, %v409
      %v467 = vadd.f32 %v466, %v411
      %v468 = vadd.f32 %v467, %v414
      %v469 = vadd.f32 %v468, %v416
      %v470 = vadd.f32 %v469, %v419
      %v471 = vadd.f32 %v470, %v421
      %v472 = vadd.f32 %v471, %v424
      %v473 = vadd.f32 %v472, %v426
      %v474 = vadd.f32 %v473, %v429
      %v475 = vadd.f32 %v474, %v431
      %v476 = vadd.f32 %v475, %v434
      %v477 = vadd.f32 %v476, %v436
      %v478 = vadd.f32 %v477, %v439
      %v479 = vadd.f32 %v478, %v441
      %v480 = vadd.f32 %v479, %v444
      %v481 = vadd.f32 %v480, %v446
      %v482 = vadd.f32 %v481, %v449
      %v483 = vadd.f32 %v482, %v451
      %v484 = vrot.slane %v483, 4
      %v485 = vadd.f32 %v483, %v484
      %v486 = vrot.slane %v485, 2
      %v487 = vadd.f32 %v485, %v486
      %v488 = vrot.slane %v487, 1
      %v489 = vadd.f32 %v487, %v488
      %v490 = vadd.f32 %v489, 0.0
      %v491 = vmul.f32 %v374, %v374
      %v492 = vmul.f32 %v376, %v376
      %v493 = vmul.f32 %v379, %v379
      %v494 = vmul.f32 %v381, %v381
      %v495 = vmul.f32 %v384, %v384
      %v496 = vmul.f32 %v386, %v386
      %v497 = vmul.f32 %v389, %v389
      %v498 = vmul.f32 %v391, %v391
      %v499 = vmul.f32 %v394, %v394
      %v500 = vmul.f32 %v396, %v396
      %v501 = vmul.f32 %v399, %v399
      %v502 = vmul.f32 %v401, %v401
      %v503 = vmul.f32 %v404, %v404
      %v504 = vmul.f32 %v406, %v406
      %v505 = vmul.f32 %v409, %v409
      %v506 = vmul.f32 %v411, %v411
      %v507 = vmul.f32 %v414, %v414
      %v508 = vmul.f32 %v416, %v416
      %v509 = vmul.f32 %v419, %v419
      %v510 = vmul.f32 %v421, %v421
      %v511 = vmul.f32 %v424, %v424
      %v512 = vmul.f32 %v426, %v426
      %v513 = vmul.f32 %v429, %v429
      %v514 = vmul.f32 %v431, %v431
      %v515 = vmul.f32 %v434, %v434
      %v516 = vmul.f32 %v436, %v436
      %v517 = vmul.f32 %v439, %v439
      %v518 = vmul.f32 %v441, %v441
      %v519 = vmul.f32 %v444, %v444
      %v520 = vmul.f32 %v446, %v446
      %v521 = vmul.f32 %v449, %v449
      %v522 = vmul.f32 %v451, %v451
      %v523 = vadd.f32 %v491, %v492
      %v524 = vadd.f32 %v523, %v493
      %v525 = vadd.f32 %v524, %v494
      %v526 = vadd.f32 %v525, %v495
      %v527 = vadd.f32 %v526, %v496
      %v528 = vadd.f32 %v527, %v497
      %v529 = vadd.f32 %v528, %v498
      %v530 = vadd.f32 %v529, %v499
      %v531 = vadd.f32 %v530, %v500
      %v532 = vadd.f32 %v531, %v501
      %v533 = vadd.f32 %v532, %v502
      %v534 = vadd.f32 %v533, %v503
      %v535 = vadd.f32 %v534, %v504
      %v536 = vadd.f32 %v535, %v505
      %v537 = vadd.f32 %v536, %v506
      %v538 = vadd.f32 %v537, %v507
      %v539 = vadd.f32 %v538, %v508
      %v540 = vadd.f32 %v539, %v509
      %v541 = vadd.f32 %v540, %v510
      %v542 = vadd.f32 %v541, %v511
      %v543 = vadd.f32 %v542, %v512
      %v544 = vadd.f32 %v543, %v513
      %v545 = vadd.f32 %v544, %v514
      %v546 = vadd.f32 %v545, %v515
      %v547 = vadd.f32 %v546, %v516
      %v548 = vadd.f32 %v547, %v517
      %v549 = vadd.f32 %v548, %v518
      %v550 = vadd.f32 %v549, %v519
      %v551 = vadd.f32 %v550, %v520
      %v552 = vadd.f32 %v551, %v521
      %v553 = vadd.f32 %v552, %v522
      %v554 = vrot.slane %v553, 4
      %v555 = vadd.f32 %v553, %v554
      %v556 = vrot.slane %v555, 2
      %v557 = vadd.f32 %v555, %v556
      %v558 = vrot.slane %v557, 1
      %v559 = vadd.f32 %v557, %v558
      %v560 = vadd.f32 %v559, 0.0
      %561 = vst [vmem:[%s177] sm:$0x1] %v490
      %562 = vst [vmem:[%s177 + $0x1] sm:$0x1] %v560
      %p563 = scmp.lt.s32.totalorder %s17, 1
      %s564 = scalar_select %p563, %s17, 1
      %p565 = scmp.lt.s32.totalorder %s18, 0
      %s566 = scalar_select %p565, %s18, 0
      %s567 = sadd.s32 %s566, %s564
      %s568 = smul.addr %s567, 2
      %s569 = scalar_lea.vmem %s2, %s568
      // Predicated region
      $region29: #{conv_bn_forward.2} parent=27 // pred_check
        %p570 = pneg %p94
      $region30: #{conv_bn_forward.2} parent=27 // pred_check_branch
        %572 = sbr.rel (%p570) target = $region32
      $region31: #{conv_bn_forward.2} parent=27 // pred_region
        _
      $region32: #{conv_bn_forward.2} parent=27 // pred_fallthru
        _
    $region28: #{conv_bn_forward.2} parent=5 // pred_fallthru
      _
    %p573 = scmp.le.s32.totalorder 2, %s8
    // Predicated region
    $region33: #{conv_bn_forward.2} parent=5 // pred_check
      %p574 = pneg %p573
    $region34: #{conv_bn_forward.2} parent=5 // pred_check_branch
      %576 = sbr.rel (%p574) target = $region36
    $region35: #{conv_bn_forward.2} parent=5 // pred_region
      %s577 = ssub.s32 %s8, 2
      // Predicated region
      $region37: #{conv_bn_forward.2} parent=35 // pred_check
        %p578 = pneg %p100
      $region38: #{conv_bn_forward.2} parent=35 // pred_check_branch
        %580 = sbr.rel (%p578) target = $region40
      $region39: #{conv_bn_forward.2} parent=35 // pred_region
        %p581 = scmp.lt.s32.totalorder %s19, 1
        %s582 = scalar_select %p581, %s19, 1
        %p583 = scmp.lt.s32.totalorder %s20, 0
        %s584 = scalar_select %p583, %s20, 0
        %s585 = sadd.s32 %s584, %s582
        %s586 = smul.addr %s585, 2
        %s587 = scalar_lea.vmem %s2, %s586
      $region40: #{conv_bn_forward.2} parent=35 // pred_fallthru
        _
    $region36: #{conv_bn_forward.2} parent=5 // pred_fallthru
      _
  $region6: #{conv_bn_forward.2} parent=0 // loop_footer
    %s12 = sadd.s32 1, %s8
  $region7: #{conv_bn_forward.2} parent=0 // loop_footer_branch
    %7 = sbr.rel target = $region3
  $region8: #{conv_bn_forward.2} parent=0 // loop_exit
    _

</llo_original>
